<compile_context>
chip_gen: v5e
topology: v5e:2x2
jax: 0.10.0
libtpu: 0.0.40
codegen_flags: <defaults>
</compile_context>

<pallas_src>
import functools

import jax
import jax.numpy as jnp
from jax import lax
from jax.experimental import pallas as pl
from jax.experimental.pallas import tpu as pltpu

_LANE = 128


def _round_up(x, m):
    return ((x + m - 1) // m) * m


def _actor_kernel(x_ref, w1_ref, b1_ref, w2_ref, b2_ref, w3_ref, b3_ref,
                  probs_ref, logp_ref, *, action_dim):
    # ---- Linear 1 + ReLU ---------------------------------------------------
    x = x_ref[...]                                           # (TM, S_pad) f32
    h1 = jnp.dot(x, w1_ref[...], preferred_element_type=jnp.float32)
    h1 = jnp.maximum(h1 + b1_ref[...], 0.0)                  # (TM, H_pad)

    # ---- Linear 2 + ReLU ---------------------------------------------------
    h2 = jnp.dot(h1, w2_ref[...], preferred_element_type=jnp.float32)
    h2 = jnp.maximum(h2 + b2_ref[...], 0.0)                  # (TM, H_pad)

    # ---- Linear 3 (logits) ---------------------------------------------------
    logits = jnp.dot(h2, w3_ref[...], preferred_element_type=jnp.float32)
    logits = logits + b3_ref[...]                            # (TM, A_pad)

    # Mask padded action lanes so they contribute nothing to the softmax.
    lane = lax.broadcasted_iota(jnp.int32, logits.shape, dimension=1)
    logits = jnp.where(lane < action_dim, logits, -1e30)

    # ---- Softmax over last axis (numerically stable, exact normalization) ----
    m = jnp.max(logits, axis=-1, keepdims=True)
    e = jnp.exp(logits - m)
    denom = jnp.sum(e, axis=-1, keepdims=True)               # >= 1.0
    inv = 1.0 / denom                                        # exact f32 per-row

    probs_ref[...] = (e * inv).astype(probs_ref.dtype)
    logp_ref[...] = ((logits - m) - jnp.log(denom)).astype(logp_ref.dtype)


@functools.partial(jax.jit, static_argnames=("block_batch",))
def actor_forward(state, w1, b1, w2, b2, w3, b3, *, block_batch=256):
    """Actor forward pass.

    Returns (probs, log_probs), each of shape (batch, action_dim); this fully
    describes the Categorical distribution of the PyTorch module (sampling:
    jax.random.categorical(key, log_probs, axis=-1)).
    """
    assert block_batch % 8 == 0, "block_batch must be a multiple of 8 (f32 sublane)"
    batch, state_dim = state.shape
    hidden_dim = w1.shape[1]
    action_dim = w3.shape[1]

    # Lane-dense padded feature dims and tile-aligned batch.
    s_p = _round_up(state_dim, _LANE)
    h_p = _round_up(hidden_dim, _LANE)
    a_p = _round_up(action_dim, _LANE)
    tm = min(block_batch, _round_up(batch, 8))
    b_p = _round_up(batch, tm)

    f32 = jnp.float32
    x = jnp.pad(state.astype(f32), ((0, b_p - batch), (0, s_p - state_dim)))
    w1p = jnp.pad(w1.astype(f32), ((0, s_p - state_dim), (0, h_p - hidden_dim)))
    b1p = jnp.pad(b1.astype(f32), ((0, 0), (0, h_p - hidden_dim)))
    w2p = jnp.pad(w2.astype(f32), ((0, h_p - hidden_dim), (0, h_p - hidden_dim)))
    b2p = jnp.pad(b2.astype(f32), ((0, 0), (0, h_p - hidden_dim)))
    w3p = jnp.pad(w3.astype(f32), ((0, h_p - hidden_dim), (0, a_p - action_dim)))
    b3p = jnp.pad(b3.astype(f32), ((0, 0), (0, a_p - action_dim)))

    grid = (b_p // tm,)

    # Activations / outputs stream over the batch grid; weights stay resident.
    x_spec = pl.BlockSpec((tm, s_p), lambda i: (i, 0),
                          memory_space=pltpu.MemorySpace.VMEM)
    out_spec = pl.BlockSpec((tm, a_p), lambda i: (i, 0),
                            memory_space=pltpu.MemorySpace.VMEM)

    def resident(arr):
        return pl.BlockSpec(arr.shape, lambda i: (0, 0),
                            memory_space=pltpu.MemorySpace.VMEM)

    probs_p, logp_p = pl.pallas_call(
        functools.partial(_actor_kernel, action_dim=action_dim),
        out_shape=(jax.ShapeDtypeStruct((b_p, a_p), jnp.float32),
                   jax.ShapeDtypeStruct((b_p, a_p), jnp.float32)),
        grid=grid,
        in_specs=[x_spec,
                  resident(w1p), resident(b1p),
                  resident(w2p), resident(b2p),
                  resident(w3p), resident(b3p)],
        out_specs=(out_spec, out_spec),
        compiler_params=pltpu.CompilerParams(
            dimension_semantics=("parallel",)),
    )(x, w1p, b1p, w2p, b2p, w3p, b3p)

    return probs_p[:batch, :action_dim], logp_p[:batch, :action_dim]


def init_actor_params(key, state_dim, hidden_dim, action_dim):
    """PyTorch-style init: U(-1/sqrt(fan_in), 1/sqrt(fan_in)).

    Weights stored as (in_features, out_features); biases as (1, out).
    """
    ks = jax.random.split(key, 6)

    def linear(kw, kb, fan_in, fan_out):
        bound = 1.0 / jnp.sqrt(jnp.float32(fan_in))
        w = jax.random.uniform(kw, (fan_in, fan_out), jnp.float32, -bound, bound)
        b = jax.random.uniform(kb, (1, fan_out), jnp.float32, -bound, bound)
        return w, b

    w1, b1 = linear(ks[0], ks[1], state_dim, hidden_dim)
    w2, b2 = linear(ks[2], ks[3], hidden_dim, hidden_dim)
    w3, b3 = linear(ks[4], ks[5], hidden_dim, action_dim)
    return w1, b1, w2, b2, w3, b3


if __name__ == "__main__":
    # Small RL-actor shapes; batch=256 exercises a 2-step batch-tiled grid.
    batch, state_dim, hidden_dim, action_dim = 256, 16, 32, 8

    key = jax.random.PRNGKey(0)
    k_state, k_params = jax.random.split(key)

    state = jax.random.normal(k_state, (batch, state_dim), jnp.float32)
    params = init_actor_params(k_params, state_dim, hidden_dim, action_dim)

    probs, log_probs = actor_forward(state, *params, block_batch=128)
    probs = jax.block_until_ready(probs)
    log_probs = jax.block_until_ready(log_probs)

    # Pure-JAX reference of the same forward pass.
    w1, b1, w2, b2, w3, b3 = params
    h = jnp.maximum(state @ w1 + b1, 0.0)
    h = jnp.maximum(h @ w2 + b2, 0.0)
    ref = jax.nn.softmax(h @ w3 + b3, axis=-1)

    assert probs.shape == (batch, action_dim)
    assert log_probs.shape == (batch, action_dim)
    # Exact f32 normalization inside the kernel -> rows sum to 1 tightly.
    assert jnp.allclose(jnp.sum(probs, axis=-1), 1.0, atol=1e-3)
    # Loose-ish tolerances cover MXU f32 matmul pass differences vs. XLA.
    assert jnp.allclose(probs, ref, atol=2e-3, rtol=2e-3)
    assert jnp.allclose(log_probs, jnp.log(ref), atol=2e-3, rtol=2e-3)

    # Categorical sampling downstream: jax.random.categorical(key, log_probs)
    print("KERNEL_OK")
</pallas_src>

<mosaic_0001>
module attributes {stable_mosaic.version = 11 : i64} {
  func.func @_actor_kernel(%arg0: i32, %arg1: memref<128x128xf32, #tpu.memory_space<vmem>>, %arg2: memref<128x128xf32, #tpu.memory_space<vmem>>, %arg3: memref<1x128xf32, #tpu.memory_space<vmem>>, %arg4: memref<128x128xf32, #tpu.memory_space<vmem>>, %arg5: memref<1x128xf32, #tpu.memory_space<vmem>>, %arg6: memref<128x128xf32, #tpu.memory_space<vmem>>, %arg7: memref<1x128xf32, #tpu.memory_space<vmem>>, %arg8: memref<128x128xf32, #tpu.memory_space<vmem>>, %arg9: memref<128x128xf32, #tpu.memory_space<vmem>>) attributes {dimension_semantics = [#tpu.dimension_semantics<parallel>], iteration_bounds = array<i64: 2>, scalar_prefetch = 0 : i64, scratch_operands = 0 : i64, tpu.core_type = #tpu.core_type<tc>, window_params = [{transform_indices = @transform_0, window_bounds = array<i64: 128, 128>}, {pipeline_mode = #tpu.pipeline_mode<synchronous>, transform_indices = @transform_1, window_bounds = array<i64: 128, 128>}, {pipeline_mode = #tpu.pipeline_mode<synchronous>, transform_indices = @transform_2, window_bounds = array<i64: 1, 128>}, {pipeline_mode = #tpu.pipeline_mode<synchronous>, transform_indices = @transform_3, window_bounds = array<i64: 128, 128>}, {pipeline_mode = #tpu.pipeline_mode<synchronous>, transform_indices = @transform_4, window_bounds = array<i64: 1, 128>}, {pipeline_mode = #tpu.pipeline_mode<synchronous>, transform_indices = @transform_5, window_bounds = array<i64: 128, 128>}, {pipeline_mode = #tpu.pipeline_mode<synchronous>, transform_indices = @transform_6, window_bounds = array<i64: 1, 128>}, {transform_indices = @transform_7, window_bounds = array<i64: 128, 128>}, {transform_indices = @transform_8, window_bounds = array<i64: 128, 128>}]} {
    %c0 = arith.constant 0 : index
    %c0_0 = arith.constant 0 : index
    %0 = vector.load %arg1[%c0, %c0_0] : memref<128x128xf32, #tpu.memory_space<vmem>>, vector<128x128xf32>
    %c0_1 = arith.constant 0 : index
    %c0_2 = arith.constant 0 : index
    %1 = vector.load %arg2[%c0_1, %c0_2] : memref<128x128xf32, #tpu.memory_space<vmem>>, vector<128x128xf32>
    %cst = arith.constant dense<0.000000e+00> : vector<128x128xf32>
    %2 = tpu.matmul %0, %1, %cst {dimension_numbers = #tpu.dot_dimension_numbers<[1], [0], [0], [1], [0, 0, 1, 1], [], []>} : vector<128x128xf32>, vector<128x128xf32>, vector<128x128xf32> -> vector<128x128xf32>
    %c0_3 = arith.constant 0 : index
    %c0_4 = arith.constant 0 : index
    %3 = vector.load %arg3[%c0_3, %c0_4] : memref<1x128xf32, #tpu.memory_space<vmem>>, vector<1x128xf32>
    %4 = vector.broadcast %3 : vector<1x128xf32> to vector<128x128xf32>
    %5 = arith.addf %2, %4 : vector<128x128xf32>
    %cst_5 = arith.constant 0.000000e+00 : f32
    %6 = vector.broadcast %cst_5 : f32 to vector<128x128xf32>
    %7 = arith.maximumf %5, %6 : vector<128x128xf32>
    %c0_6 = arith.constant 0 : index
    %c0_7 = arith.constant 0 : index
    %8 = vector.load %arg4[%c0_6, %c0_7] : memref<128x128xf32, #tpu.memory_space<vmem>>, vector<128x128xf32>
    %cst_8 = arith.constant dense<0.000000e+00> : vector<128x128xf32>
    %9 = tpu.matmul %7, %8, %cst_8 {dimension_numbers = #tpu.dot_dimension_numbers<[1], [0], [0], [1], [0, 0, 1, 1], [], []>} : vector<128x128xf32>, vector<128x128xf32>, vector<128x128xf32> -> vector<128x128xf32>
    %c0_9 = arith.constant 0 : index
    %c0_10 = arith.constant 0 : index
    %10 = vector.load %arg5[%c0_9, %c0_10] : memref<1x128xf32, #tpu.memory_space<vmem>>, vector<1x128xf32>
    %11 = vector.broadcast %10 : vector<1x128xf32> to vector<128x128xf32>
    %12 = arith.addf %9, %11 : vector<128x128xf32>
    %cst_11 = arith.constant 0.000000e+00 : f32
    %13 = vector.broadcast %cst_11 : f32 to vector<128x128xf32>
    %14 = arith.maximumf %12, %13 : vector<128x128xf32>
    %c0_12 = arith.constant 0 : index
    %c0_13 = arith.constant 0 : index
    %15 = vector.load %arg6[%c0_12, %c0_13] : memref<128x128xf32, #tpu.memory_space<vmem>>, vector<128x128xf32>
    %cst_14 = arith.constant dense<0.000000e+00> : vector<128x128xf32>
    %16 = tpu.matmul %14, %15, %cst_14 {dimension_numbers = #tpu.dot_dimension_numbers<[1], [0], [0], [1], [0, 0, 1, 1], [], []>} : vector<128x128xf32>, vector<128x128xf32>, vector<128x128xf32> -> vector<128x128xf32>
    %c0_15 = arith.constant 0 : index
    %c0_16 = arith.constant 0 : index
    %17 = vector.load %arg7[%c0_15, %c0_16] : memref<1x128xf32, #tpu.memory_space<vmem>>, vector<1x128xf32>
    %18 = vector.broadcast %17 : vector<1x128xf32> to vector<128x128xf32>
    %19 = arith.addf %16, %18 : vector<128x128xf32>
    %20 = tpu.iota {dimensions = array<i32: 1>} : vector<128x128xi32>
    %c8_i32 = arith.constant 8 : i32
    %21 = vector.broadcast %c8_i32 : i32 to vector<128x128xi32>
    %22 = arith.cmpi slt, %20, %21 : vector<128x128xi32>
    %cst_17 = arith.constant -1.000000e+30 : f32
    %23 = vector.broadcast %cst_17 : f32 to vector<128x128xf32>
    %24 = arith.select %22, %19, %23 : vector<128x128xi1>, vector<128x128xf32>
    %cst_18 = arith.constant dense<0xFF800000> : vector<128xf32>
    %25 = vector.multi_reduction <maximumf>, %24, %cst_18 [1] : vector<128x128xf32> to vector<128xf32>
    %26 = vector.shape_cast %25 : vector<128xf32> to vector<128x1xf32>
    %27 = vector.broadcast %26 : vector<128x1xf32> to vector<128x128xf32>
    %28 = arith.subf %24, %27 : vector<128x128xf32>
    %29 = math.exp %28 : vector<128x128xf32>
    %cst_19 = arith.constant dense<0.000000e+00> : vector<128xf32>
    %30 = vector.multi_reduction <add>, %29, %cst_19 [1] : vector<128x128xf32> to vector<128xf32>
    %31 = vector.shape_cast %30 : vector<128xf32> to vector<128x1xf32>
    %cst_20 = arith.constant 1.000000e+00 : f32
    %32 = vector.broadcast %cst_20 : f32 to vector<128x1xf32>
    %33 = arith.divf %32, %31 : vector<128x1xf32>
    %34 = vector.broadcast %33 : vector<128x1xf32> to vector<128x128xf32>
    %35 = arith.mulf %29, %34 : vector<128x128xf32>
    %c0_21 = arith.constant 0 : index
    %c0_22 = arith.constant 0 : index
    %36 = vector.load %arg8[%c0_21, %c0_22] : memref<128x128xf32, #tpu.memory_space<vmem>>, vector<128x128xf32>
    tpu.vector_store %arg8[%c0_21, %c0_22], %35 {strides = array<i32>} : memref<128x128xf32, #tpu.memory_space<vmem>>, vector<128x128xf32>,
    %37 = vector.broadcast %26 : vector<128x1xf32> to vector<128x128xf32>
    %38 = arith.subf %24, %37 : vector<128x128xf32>
    %39 = math.log %31 : vector<128x1xf32>
    %40 = vector.broadcast %39 : vector<128x1xf32> to vector<128x128xf32>
    %41 = arith.subf %38, %40 : vector<128x128xf32>
    %c0_23 = arith.constant 0 : index
    %c0_24 = arith.constant 0 : index
    %42 = vector.load %arg9[%c0_23, %c0_24] : memref<128x128xf32, #tpu.memory_space<vmem>>, vector<128x128xf32>
    tpu.vector_store %arg9[%c0_23, %c0_24], %41 {strides = array<i32>} : memref<128x128xf32, #tpu.memory_space<vmem>>, vector<128x128xf32>,
    return
  }
  func.func @transform_0(%arg0: i32) -> (i32, i32) {
    %c0_i32 = arith.constant 0 : i32
    %c0_i32_0 = arith.constant 0 : i32
    return %arg0, %c0_i32 : i32, i32
  }
  func.func @transform_1(%arg0: i32) -> (i32, i32) {
    %c0_i32 = arith.constant 0 : i32
    %c0_i32_0 = arith.constant 0 : i32
    %c0_i32_1 = arith.constant 0 : i32
    return %c0_i32, %c0_i32_0 : i32, i32
  }
  func.func @transform_2(%arg0: i32) -> (i32, i32) {
    %c0_i32 = arith.constant 0 : i32
    %c0_i32_0 = arith.constant 0 : i32
    %c0_i32_1 = arith.constant 0 : i32
    return %c0_i32, %c0_i32_0 : i32, i32
  }
  func.func @transform_3(%arg0: i32) -> (i32, i32) {
    %c0_i32 = arith.constant 0 : i32
    %c0_i32_0 = arith.constant 0 : i32
    %c0_i32_1 = arith.constant 0 : i32
    return %c0_i32, %c0_i32_0 : i32, i32
  }
  func.func @transform_4(%arg0: i32) -> (i32, i32) {
    %c0_i32 = arith.constant 0 : i32
    %c0_i32_0 = arith.constant 0 : i32
    %c0_i32_1 = arith.constant 0 : i32
    return %c0_i32, %c0_i32_0 : i32, i32
  }
  func.func @transform_5(%arg0: i32) -> (i32, i32) {
    %c0_i32 = arith.constant 0 : i32
    %c0_i32_0 = arith.constant 0 : i32
    %c0_i32_1 = arith.constant 0 : i32
    return %c0_i32, %c0_i32_0 : i32, i32
  }
  func.func @transform_6(%arg0: i32) -> (i32, i32) {
    %c0_i32 = arith.constant 0 : i32
    %c0_i32_0 = arith.constant 0 : i32
    %c0_i32_1 = arith.constant 0 : i32
    return %c0_i32, %c0_i32_0 : i32, i32
  }
  func.func @transform_7(%arg0: i32) -> (i32, i32) {
    %c0_i32 = arith.constant 0 : i32
    %c0_i32_0 = arith.constant 0 : i32
    return %arg0, %c0_i32 : i32, i32
  }
  func.func @transform_8(%arg0: i32) -> (i32, i32) {
    %c0_i32 = arith.constant 0 : i32
    %c0_i32_0 = arith.constant 0 : i32
    return %arg0, %c0_i32 : i32, i32
  }
}

</mosaic_0001>

<llo_original>
// kernel: actor_forward.1
$region0: #{actor_forward.1}
  #allocation0 [shape = 'u32[]', space=smem, size = 0x4, offset = 0x4, fixed_abs, tag = 'smem constant byte address 0x4 - core index']
  #allocation1 [shape = 'u32[72,128]{1,0:T(1,128)}', space=vmem, size = 0x9000, scoped, tag = 'internal scratch']
  %s0 = inlined_call_operand.vmem [shape: f32[256,128], index: 0, kind: input, shape index: {}]
  %s1 = inlined_call_operand.vmem [shape: f32[128,128], index: 1, kind: input, shape index: {}]
  %s2 = inlined_call_operand.vmem [shape: f32[1,128], index: 2, kind: input, shape index: {}]
  %s3 = inlined_call_operand.vmem [shape: f32[128,128], index: 3, kind: input, shape index: {}]
  %s4 = inlined_call_operand.vmem [shape: f32[1,128], index: 4, kind: input, shape index: {}]
  %s5 = inlined_call_operand.vmem [shape: f32[128,128], index: 5, kind: input, shape index: {}]
  %s6 = inlined_call_operand.vmem [shape: f32[1,128], index: 6, kind: input, shape index: {}]
  %s7 = inlined_call_operand.vmem [shape: f32[256,128], index: 7, kind: output, shape index: {0}]
  %s8 = inlined_call_operand.vmem [shape: f32[256,128], index: 8, kind: output, shape index: {1}]
  %9 = xla_tuple %s7, %s8
  %s10 = sld [smem:[#allocation0]]
  $region69: #{actor_forward.1} parent=0
    _
  %s12 = ssub.s32 1, %s10
  %s13 = scalar_select 0, %s12, %s10
  loop: start=0, step=1, limit=4
  $region2: #{actor_forward.1} parent=0 // loop_pre_header
    _
  $region3: #{actor_forward.1} parent=0 // loop_header
    %s15 = sphi 0, %s19
    %p16 = scmp.ge.s32.totalorder %s15, 4
    %s25 = sphi 0, %s27
    %s28 = sphi 0, %s25
    %s29 = sphi 0, %s28
    %s45 = sphi 0, %s29
    %s49 = sphi 0, %s49
    %s51 = sphi 0, %s49
    %s52 = sphi 0, %s51
    %s66 = sphi 0, %s52
    %s70 = sphi 0, %s70
    %s72 = sphi 0, %s70
    %s73 = sphi 0, %s72
    %s87 = sphi 0, %s73
    %s91 = sphi 0, %s91
    %s93 = sphi 0, %s91
    %s94 = sphi 0, %s93
    %s108 = sphi 0, %s94
    %s112 = sphi 0, %s112
    %s114 = sphi 0, %s112
    %s115 = sphi 0, %s114
    %s129 = sphi 0, %s115
    %s133 = sphi 0, %s133
    %s135 = sphi 0, %s133
    %s136 = sphi 0, %s135
    %s150 = sphi 0, %s136
    %s154 = sphi 0, %s154
    %s156 = sphi 0, %s154
    %s157 = sphi 0, %s156
    %s171 = sphi 0, %s157
    %s177 = sphi 0, %s179
    %s180 = sphi 0, %s177
    %s181 = sphi 0, %s180
    %s197 = sphi 0, %s181
    %s203 = sphi 0, %s205
    %s206 = sphi 0, %s203
    %s207 = sphi 0, %s206
    %s223 = sphi 0, %s207
  $region4: #{actor_forward.1} parent=0 // loop_header_branch
    %18 = sbr.rel (%p16) target = $region8
  $region5: #{actor_forward.1} parent=0 // loop_body
    %s20 = ssub.s32 %s15, 1
    %s21 = ssub.s32 %s15, 2
    %s22 = sadd.s32 %s15, 1
    %s23 = ssub.s32 %s15, %s22
    %p24 = scmp.eq.s32.totalorder %s23, 0
    %s26 = sadd.s32 %s25, 1
    %s27 = scalar_select %p24, %s25, %s26
    %p30 = pneg %p24
    %p31 = scmp.eq.s32.totalorder %s15, 1
    %p32 = por %p30, %p31
    %p33 = scmp.ne.s32.totalorder %s25, %s28
    %p34 = scmp.eq.s32.totalorder %s15, 0
    %p35 = por %p33, %p34
    %p36 = scmp.ne.s32.totalorder %s25, %s28
    %p37 = scmp.eq.s32.totalorder %s20, 1
    %p38 = por %p36, %p37
    %p39 = scmp.ne.s32.totalorder %s28, %s29
    %p40 = scmp.eq.s32.totalorder %s20, 0
    %p41 = por %p39, %p40
    %p42 = scmp.ne.s32.totalorder %s28, %s29
    %p43 = scmp.eq.s32.totalorder %s21, 1
    %p44 = por %p42, %p43
    %p46 = scmp.ne.s32.totalorder %s29, %s45
    %p47 = scmp.eq.s32.totalorder %s21, 0
    %p48 = por %p46, %p47
    %s50 = sadd.s32 %s49, 1
    %p53 = scmp.eq.s32.totalorder %s15, 1
    %p54 = scmp.ne.s32.totalorder %s49, %s51
    %p55 = scmp.eq.s32.totalorder %s15, 0
    %p56 = por %p54, %p55
    %p57 = scmp.ne.s32.totalorder %s49, %s51
    %p58 = scmp.eq.s32.totalorder %s20, 1
    %p59 = por %p57, %p58
    %p60 = scmp.ne.s32.totalorder %s51, %s52
    %p61 = scmp.eq.s32.totalorder %s20, 0
    %p62 = por %p60, %p61
    %p63 = scmp.ne.s32.totalorder %s51, %s52
    %p64 = scmp.eq.s32.totalorder %s21, 1
    %p65 = por %p63, %p64
    %p67 = scmp.ne.s32.totalorder %s52, %s66
    %p68 = scmp.eq.s32.totalorder %s21, 0
    %p69 = por %p67, %p68
    %s71 = sadd.s32 %s70, 1
    %p74 = scmp.eq.s32.totalorder %s15, 1
    %p75 = scmp.ne.s32.totalorder %s70, %s72
    %p76 = scmp.eq.s32.totalorder %s15, 0
    %p77 = por %p75, %p76
    %p78 = scmp.ne.s32.totalorder %s70, %s72
    %p79 = scmp.eq.s32.totalorder %s20, 1
    %p80 = por %p78, %p79
    %p81 = scmp.ne.s32.totalorder %s72, %s73
    %p82 = scmp.eq.s32.totalorder %s20, 0
    %p83 = por %p81, %p82
    %p84 = scmp.ne.s32.totalorder %s72, %s73
    %p85 = scmp.eq.s32.totalorder %s21, 1
    %p86 = por %p84, %p85
    %p88 = scmp.ne.s32.totalorder %s73, %s87
    %p89 = scmp.eq.s32.totalorder %s21, 0
    %p90 = por %p88, %p89
    %s92 = sadd.s32 %s91, 1
    %p95 = scmp.eq.s32.totalorder %s15, 1
    %p96 = scmp.ne.s32.totalorder %s91, %s93
    %p97 = scmp.eq.s32.totalorder %s15, 0
    %p98 = por %p96, %p97
    %p99 = scmp.ne.s32.totalorder %s91, %s93
    %p100 = scmp.eq.s32.totalorder %s20, 1
    %p101 = por %p99, %p100
    %p102 = scmp.ne.s32.totalorder %s93, %s94
    %p103 = scmp.eq.s32.totalorder %s20, 0
    %p104 = por %p102, %p103
    %p105 = scmp.ne.s32.totalorder %s93, %s94
    %p106 = scmp.eq.s32.totalorder %s21, 1
    %p107 = por %p105, %p106
    %p109 = scmp.ne.s32.totalorder %s94, %s108
    %p110 = scmp.eq.s32.totalorder %s21, 0
    %p111 = por %p109, %p110
    %s113 = sadd.s32 %s112, 1
    %p116 = scmp.eq.s32.totalorder %s15, 1
    %p117 = scmp.ne.s32.totalorder %s112, %s114
    %p118 = scmp.eq.s32.totalorder %s15, 0
    %p119 = por %p117, %p118
    %p120 = scmp.ne.s32.totalorder %s112, %s114
    %p121 = scmp.eq.s32.totalorder %s20, 1
    %p122 = por %p120, %p121
    %p123 = scmp.ne.s32.totalorder %s114, %s115
    %p124 = scmp.eq.s32.totalorder %s20, 0
    %p125 = por %p123, %p124
    %p126 = scmp.ne.s32.totalorder %s114, %s115
    %p127 = scmp.eq.s32.totalorder %s21, 1
    %p128 = por %p126, %p127
    %p130 = scmp.ne.s32.totalorder %s115, %s129
    %p131 = scmp.eq.s32.totalorder %s21, 0
    %p132 = por %p130, %p131
    %s134 = sadd.s32 %s133, 1
    %p137 = scmp.eq.s32.totalorder %s15, 1
    %p138 = scmp.ne.s32.totalorder %s133, %s135
    %p139 = scmp.eq.s32.totalorder %s15, 0
    %p140 = por %p138, %p139
    %p141 = scmp.ne.s32.totalorder %s133, %s135
    %p142 = scmp.eq.s32.totalorder %s20, 1
    %p143 = por %p141, %p142
    %p144 = scmp.ne.s32.totalorder %s135, %s136
    %p145 = scmp.eq.s32.totalorder %s20, 0
    %p146 = por %p144, %p145
    %p147 = scmp.ne.s32.totalorder %s135, %s136
    %p148 = scmp.eq.s32.totalorder %s21, 1
    %p149 = por %p147, %p148
    %p151 = scmp.ne.s32.totalorder %s136, %s150
    %p152 = scmp.eq.s32.totalorder %s21, 0
    %p153 = por %p151, %p152
    %s155 = sadd.s32 %s154, 1
    %p158 = scmp.eq.s32.totalorder %s15, 1
    %p159 = scmp.ne.s32.totalorder %s154, %s156
    %p160 = scmp.eq.s32.totalorder %s15, 0
    %p161 = por %p159, %p160
    %p162 = scmp.ne.s32.totalorder %s154, %s156
    %p163 = scmp.eq.s32.totalorder %s20, 1
    %p164 = por %p162, %p163
    %p165 = scmp.ne.s32.totalorder %s156, %s157
    %p166 = scmp.eq.s32.totalorder %s20, 0
    %p167 = por %p165, %p166
    %p168 = scmp.ne.s32.totalorder %s156, %s157
    %p169 = scmp.eq.s32.totalorder %s21, 1
    %p170 = por %p168, %p169
    %p172 = scmp.ne.s32.totalorder %s157, %s171
    %p173 = scmp.eq.s32.totalorder %s21, 0
    %p174 = por %p172, %p173
    %s175 = ssub.s32 %s15, %s22
    %p176 = scmp.eq.s32.totalorder %s175, 0
    %s178 = sadd.s32 %s177, 1
    %s179 = scalar_select %p176, %s177, %s178
    %p182 = pneg %p176
    %p183 = scmp.eq.s32.totalorder %s15, 1
    %p184 = por %p182, %p183
    %p185 = scmp.ne.s32.totalorder %s177, %s180
    %p186 = scmp.eq.s32.totalorder %s15, 0
    %p187 = por %p185, %p186
    %p188 = scmp.ne.s32.totalorder %s177, %s180
    %p189 = scmp.eq.s32.totalorder %s20, 1
    %p190 = por %p188, %p189
    %p191 = scmp.ne.s32.totalorder %s180, %s181
    %p192 = scmp.eq.s32.totalorder %s20, 0
    %p193 = por %p191, %p192
    %p194 = scmp.ne.s32.totalorder %s180, %s181
    %p195 = scmp.eq.s32.totalorder %s21, 1
    %p196 = por %p194, %p195
    %p198 = scmp.ne.s32.totalorder %s181, %s197
    %p199 = scmp.eq.s32.totalorder %s21, 0
    %p200 = por %p198, %p199
    %s201 = ssub.s32 %s15, %s22
    %p202 = scmp.eq.s32.totalorder %s201, 0
    %s204 = sadd.s32 %s203, 1
    %s205 = scalar_select %p202, %s203, %s204
    %p208 = pneg %p202
    %p209 = scmp.eq.s32.totalorder %s15, 1
    %p210 = por %p208, %p209
    %p211 = scmp.ne.s32.totalorder %s203, %s206
    %p212 = scmp.eq.s32.totalorder %s15, 0
    %p213 = por %p211, %p212
    %p214 = scmp.ne.s32.totalorder %s203, %s206
    %p215 = scmp.eq.s32.totalorder %s20, 1
    %p216 = por %p214, %p215
    %p217 = scmp.ne.s32.totalorder %s206, %s207
    %p218 = scmp.eq.s32.totalorder %s20, 0
    %p219 = por %p217, %p218
    %p220 = scmp.ne.s32.totalorder %s206, %s207
    %p221 = scmp.eq.s32.totalorder %s21, 1
    %p222 = por %p220, %p221
    %p224 = scmp.ne.s32.totalorder %s207, %s223
    %p225 = scmp.eq.s32.totalorder %s21, 0
    %p226 = por %p224, %p225
    %p227 = scmp.le.s32.totalorder 1, %s15
    %p228 = scmp.lt.s32.totalorder %s15, 3
    %p229 = pnand %p227, %p228
    %p230 = pneg %p229
    // Predicated region
    $region9: #{actor_forward.1} parent=5 // pred_check
      _
    $region10: #{actor_forward.1} parent=5 // pred_check_branch
      %232 = sbr.rel (%p229) target = $region12
    $region11: #{actor_forward.1} parent=5 // pred_region
      %s233 = ssub.s32 %s15, 1
      // Predicated region
      $region13: #{actor_forward.1} parent=11 // pred_check
        %p234 = pneg %p62
      $region14: #{actor_forward.1} parent=11 // pred_check_branch
        %236 = sbr.rel (%p234) target = $region16
      $region15: #{actor_forward.1} parent=11 // pred_region
        _
      $region16: #{actor_forward.1} parent=11 // pred_fallthru
        _
      // Predicated region
      $region17: #{actor_forward.1} parent=11 // pred_check
        %p237 = pneg %p83
      $region18: #{actor_forward.1} parent=11 // pred_check_branch
        %239 = sbr.rel (%p237) target = $region20
      $region19: #{actor_forward.1} parent=11 // pred_region
        _
      $region20: #{actor_forward.1} parent=11 // pred_fallthru
        _
      // Predicated region
      $region21: #{actor_forward.1} parent=11 // pred_check
        %p240 = pneg %p104
      $region22: #{actor_forward.1} parent=11 // pred_check_branch
        %242 = sbr.rel (%p240) target = $region24
      $region23: #{actor_forward.1} parent=11 // pred_region
        _
      $region24: #{actor_forward.1} parent=11 // pred_fallthru
        _
      // Predicated region
      $region25: #{actor_forward.1} parent=11 // pred_check
        %p243 = pneg %p125
      $region26: #{actor_forward.1} parent=11 // pred_check_branch
        %245 = sbr.rel (%p243) target = $region28
      $region27: #{actor_forward.1} parent=11 // pred_region
        _
      $region28: #{actor_forward.1} parent=11 // pred_fallthru
        _
      // Predicated region
      $region29: #{actor_forward.1} parent=11 // pred_check
        %p246 = pneg %p146
      $region30: #{actor_forward.1} parent=11 // pred_check_branch
        %248 = sbr.rel (%p246) target = $region32
      $region31: #{actor_forward.1} parent=11 // pred_region
        _
      $region32: #{actor_forward.1} parent=11 // pred_fallthru
        _
      // Predicated region
      $region33: #{actor_forward.1} parent=11 // pred_check
        %p249 = pneg %p167
      $region34: #{actor_forward.1} parent=11 // pred_check_branch
        %251 = sbr.rel (%p249) target = $region36
      $region35: #{actor_forward.1} parent=11 // pred_region
        _
      $region36: #{actor_forward.1} parent=11 // pred_fallthru
        _
    $region12: #{actor_forward.1} parent=5 // pred_fallthru
      _
    %p252 = scmp.lt.s32.totalorder %s15, 2
    // Predicated region
    $region37: #{actor_forward.1} parent=5 // pred_check
      %p253 = pneg %p252
    $region38: #{actor_forward.1} parent=5 // pred_check_branch
      %255 = sbr.rel (%p253) target = $region40
    $region39: #{actor_forward.1} parent=5 // pred_region
      // Predicated region
      $region41: #{actor_forward.1} parent=39 // pred_check
        %p256 = pneg %p35
      $region42: #{actor_forward.1} parent=39 // pred_check_branch
        %258 = sbr.rel (%p256) target = $region44
      $region43: #{actor_forward.1} parent=39 // pred_region
        %s259 = smul.u32 16, %s15
        %p260 = scmp.lt.s32.totalorder %s259, 31
        %s261 = scalar_select %p260, %s259, 31
        %s262 = smul.addr %s261, 8
        %s263 = scalar_lea.vmem %s0, %s262
        %s264 = smul.u32 16, %s15
      $region44: #{actor_forward.1} parent=39 // pred_fallthru
        _
    $region40: #{actor_forward.1} parent=5 // pred_fallthru
      _
    %p265 = scmp.le.s32.totalorder 1, %s15
    %p266 = scmp.lt.s32.totalorder %s15, 3
    %p267 = pnand %p265, %p266
    %p268 = pneg %p267
    // Predicated region
    $region45: #{actor_forward.1} parent=5 // pred_check
      _
    $region46: #{actor_forward.1} parent=5 // pred_check_branch
      %270 = sbr.rel (%p267) target = $region48
    $region47: #{actor_forward.1} parent=5 // pred_region
      %s271 = ssub.s32 %s15, 1
      %s272 = smul.u32 16, %s20
      %p273 = scmp.lt.s32.totalorder %s272, 31
      %s274 = scalar_select %p273, %s272, 31
      %s275 = smul.addr %s274, 8
      %s276 = scalar_lea.vmem %s0, %s275
      %p277 = pneg %p41
      %p278 = pneg %p38
      %p279 = pneg %p62
      %p280 = pneg %p59
      %p281 = pneg %p83
      %p282 = pneg %p80
      %p283 = pneg %p104
      %p284 = pneg %p101
      %p285 = pneg %p125
      %p286 = pneg %p122
      %p287 = pneg %p146
      %p288 = pneg %p143
      %p289 = pneg %p167
      %p290 = pneg %p164
      %p291 = pneg %p193
      %p292 = pneg %p190
      %s293 = smul.u32 16, %s20
      %p294 = scmp.lt.s32.totalorder %s293, 31
      %s295 = scalar_select %p294, %s293, 31
      %s296 = smul.addr %s295, 8
      %s297 = scalar_lea.vmem %s7, %s296
      %p298 = pneg %p219
      %p299 = pneg %p216
      %s300 = smul.u32 16, %s20
      %p301 = scmp.lt.s32.totalorder %s300, 31
      %s302 = scalar_select %p301, %s300, 31
      %s303 = smul.addr %s302, 8
      %s304 = scalar_lea.vmem %s8, %s303
      %s305 = smul.u32 16, %s20
      %p306 = scmp.lt.s32.totalorder %s305, 31
      %s307 = scalar_select %p306, %s305, 31
      %s308 = smul.addr %s307, 8
      %s309 = scalar_lea.vmem %s0, %s308
      %s310 = smul.u32 16, %s20
      %s311 = smul.u32 16, %s20
      %p312 = scmp.lt.s32.totalorder %s311, 31
      %s313 = scalar_select %p312, %s311, 31
      %s314 = smul.addr %s313, 8
      %s315 = scalar_lea.vmem %s7, %s314
      %s316 = smul.u32 16, %s20
      %s317 = smul.u32 16, %s20
      %p318 = scmp.lt.s32.totalorder %s317, 31
      %s319 = scalar_select %p318, %s317, 31
      %s320 = smul.addr %s319, 8
      %s321 = scalar_lea.vmem %s8, %s320
      %s322 = smul.u32 16, %s20
      %v323 = vld [vmem:[%s309] sm:$0xff]
      %v324 = vld [vmem:[%s309 + $0x8] sm:$0xff]
      %v325 = vld [vmem:[%s309 + $0x10] sm:$0xff]
      %v326 = vld [vmem:[%s309 + $0x18] sm:$0xff]
      %v327 = vld [vmem:[%s309 + $0x20] sm:$0xff]
      %v328 = vld [vmem:[%s309 + $0x28] sm:$0xff]
      %v329 = vld [vmem:[%s309 + $0x30] sm:$0xff]
      %v330 = vld [vmem:[%s309 + $0x38] sm:$0xff]
      %v331 = vld [vmem:[%s309 + $0x40] sm:$0xff]
      %v332 = vld [vmem:[%s309 + $0x48] sm:$0xff]
      %v333 = vld [vmem:[%s309 + $0x50] sm:$0xff]
      %v334 = vld [vmem:[%s309 + $0x58] sm:$0xff]
      %v335 = vld [vmem:[%s309 + $0x60] sm:$0xff]
      %v336 = vld [vmem:[%s309 + $0x68] sm:$0xff]
      %v337 = vld [vmem:[%s309 + $0x70] sm:$0xff]
      %v338 = vld [vmem:[%s309 + $0x78] sm:$0xff]
      %v339 = vld [vmem:[%s1] sm:$0xff]
      %v340 = vld [vmem:[%s1 + $0x8] sm:$0xff]
      %v341 = vld [vmem:[%s1 + $0x10] sm:$0xff]
      %v342 = vld [vmem:[%s1 + $0x18] sm:$0xff]
      %v343 = vld [vmem:[%s1 + $0x20] sm:$0xff]
      %v344 = vld [vmem:[%s1 + $0x28] sm:$0xff]
      %v345 = vld [vmem:[%s1 + $0x30] sm:$0xff]
      %v346 = vld [vmem:[%s1 + $0x38] sm:$0xff]
      %v347 = vld [vmem:[%s1 + $0x40] sm:$0xff]
      %v348 = vld [vmem:[%s1 + $0x48] sm:$0xff]
      %v349 = vld [vmem:[%s1 + $0x50] sm:$0xff]
      %v350 = vld [vmem:[%s1 + $0x58] sm:$0xff]
      %v351 = vld [vmem:[%s1 + $0x60] sm:$0xff]
      %v352 = vld [vmem:[%s1 + $0x68] sm:$0xff]
      %v353 = vld [vmem:[%s1 + $0x70] sm:$0xff]
      %v354 = vld [vmem:[%s1 + $0x78] sm:$0xff]
      %v355 = vld [vmem:[%s2] sm:$0x1]
      %v357 = vperm.slane %v355, 0
      %359 = vmatpush.msra.mxu0 %v354
      %360 = vmatpush.msra.mxu0 %v353
      %361 = vmatpush.msra.mxu0 %v352
      %362 = vmatpush.msra.mxu0 %v351
      %363 = vmatpush.msra.mxu0 %v350
      %364 = vmatpush.msra.mxu0 %v349
      %365 = vmatpush.msra.mxu0 %v348
      %366 = vmatpush.msra.mxu0 %v347
      %367 = vmatpush.msra.mxu0 %v346
      %368 = vmatpush.msra.mxu0 %v345
      %369 = vmatpush.msra.mxu0 %v344
      %370 = vmatpush.msra.mxu0 %v343
      %371 = vmatpush.msra.mxu0 %v342
      %372 = vmatpush.msra.mxu0 %v341
      %373 = vmatpush.msra.mxu0 %v340
      %374 = vmatpush.msra.mxu0 %v339
      %375 = vmatmul.f32.gmra.mxu0 %v323
      %v376 = vpop.f32.mrf.mxu0
      %v377 = vadd.f32 %v357, %v376
      %378 = vmatmul.f32.gmra.mxu0 %v324
      %v379 = vpop.f32.mrf.mxu0
      %v380 = vadd.f32 %v357, %v379
      %381 = vmatmul.f32.gmra.mxu0 %v325
      %v382 = vpop.f32.mrf.mxu0
      %v383 = vadd.f32 %v357, %v382
      %384 = vmatmul.f32.gmra.mxu0 %v326
      %v385 = vpop.f32.mrf.mxu0
      %v386 = vadd.f32 %v357, %v385
      %387 = vmatmul.f32.gmra.mxu0 %v327
      %v388 = vpop.f32.mrf.mxu0
      %v389 = vadd.f32 %v357, %v388
      %390 = vmatmul.f32.gmra.mxu0 %v328
      %v391 = vpop.f32.mrf.mxu0
      %v392 = vadd.f32 %v357, %v391
      %393 = vmatmul.f32.gmra.mxu0 %v329
      %v394 = vpop.f32.mrf.mxu0
      %v395 = vadd.f32 %v357, %v394
      %396 = vmatmul.f32.gmra.mxu0 %v330
      %v397 = vpop.f32.mrf.mxu0
      %v398 = vadd.f32 %v357, %v397
      %399 = vmatmul.f32.gmra.mxu0 %v331
      %v400 = vpop.f32.mrf.mxu0
      %v401 = vadd.f32 %v357, %v400
      %402 = vmatmul.f32.gmra.mxu0 %v332
      %v403 = vpop.f32.mrf.mxu0
      %v404 = vadd.f32 %v357, %v403
      %405 = vmatmul.f32.gmra.mxu0 %v333
      %v406 = vpop.f32.mrf.mxu0
      %v407 = vadd.f32 %v357, %v406
      %408 = vmatmul.f32.gmra.mxu0 %v334
      %v409 = vpop.f32.mrf.mxu0
      %v410 = vadd.f32 %v357, %v409
      %411 = vmatmul.f32.gmra.mxu0 %v335
      %v412 = vpop.f32.mrf.mxu0
      %v413 = vadd.f32 %v357, %v412
      %414 = vmatmul.f32.gmra.mxu0 %v336
      %v415 = vpop.f32.mrf.mxu0
      %v416 = vadd.f32 %v357, %v415
      %417 = vmatmul.f32.gmra.mxu0 %v337
      %v418 = vpop.f32.mrf.mxu0
      %v419 = vadd.f32 %v357, %v418
      %420 = vmatmul.f32.gmra.mxu0 %v338
      %v421 = vpop.f32.mrf.mxu0
      %v422 = vadd.f32 %v357, %v421
      %423 = vdwg.mxu0
      %v424 = vmax.f32 %v377, 0.0
      %v425 = vmax.f32 %v380, 0.0
      %v426 = vmax.f32 %v383, 0.0
      %v427 = vmax.f32 %v386, 0.0
      %v428 = vmax.f32 %v389, 0.0
      %v429 = vmax.f32 %v392, 0.0
      %v430 = vmax.f32 %v395, 0.0
      %v431 = vmax.f32 %v398, 0.0
      %v432 = vmax.f32 %v401, 0.0
      %v433 = vmax.f32 %v404, 0.0
      %v434 = vmax.f32 %v407, 0.0
      %v435 = vmax.f32 %v410, 0.0
      %v436 = vmax.f32 %v413, 0.0
      %v437 = vmax.f32 %v416, 0.0
      %v438 = vmax.f32 %v419, 0.0
      %v439 = vmax.f32 %v422, 0.0
      %v440 = vld [vmem:[%s3] sm:$0xff]
      %v441 = vld [vmem:[%s3 + $0x8] sm:$0xff]
      %v442 = vld [vmem:[%s3 + $0x10] sm:$0xff]
      %v443 = vld [vmem:[%s3 + $0x18] sm:$0xff]
      %v444 = vld [vmem:[%s3 + $0x20] sm:$0xff]
      %v445 = vld [vmem:[%s3 + $0x28] sm:$0xff]
      %v446 = vld [vmem:[%s3 + $0x30] sm:$0xff]
      %v447 = vld [vmem:[%s3 + $0x38] sm:$0xff]
      %v448 = vld [vmem:[%s3 + $0x40] sm:$0xff]
      %v449 = vld [vmem:[%s3 + $0x48] sm:$0xff]
      %v450 = vld [vmem:[%s3 + $0x50] sm:$0xff]
      %v451 = vld [vmem:[%s3 + $0x58] sm:$0xff]
      %v452 = vld [vmem:[%s3 + $0x60] sm:$0xff]
      %v453 = vld [vmem:[%s3 + $0x68] sm:$0xff]
      %v454 = vld [vmem:[%s3 + $0x70] sm:$0xff]
      %v455 = vld [vmem:[%s3 + $0x78] sm:$0xff]
      %v456 = vld [vmem:[%s4] sm:$0x1]
      %v458 = vperm.slane %v456, 0
      %460 = vmatpush.msra.mxu0 %v455
      %461 = vmatpush.msra.mxu0 %v454
      %462 = vmatpush.msra.mxu0 %v453
      %463 = vmatpush.msra.mxu0 %v452
      %464 = vmatpush.msra.mxu0 %v451
      %465 = vmatpush.msra.mxu0 %v450
      %466 = vmatpush.msra.mxu0 %v449
      %467 = vmatpush.msra.mxu0 %v448
      %468 = vmatpush.msra.mxu0 %v447
      %469 = vmatpush.msra.mxu0 %v446
      %470 = vmatpush.msra.mxu0 %v445
      %471 = vmatpush.msra.mxu0 %v444
      %472 = vmatpush.msra.mxu0 %v443
      %473 = vmatpush.msra.mxu0 %v442
      %474 = vmatpush.msra.mxu0 %v441
      %475 = vmatpush.msra.mxu0 %v440
      %476 = vmatmul.f32.gmra.mxu0 %v424
      %v477 = vpop.f32.mrf.mxu0
      %v478 = vadd.f32 %v458, %v477
      %479 = vmatmul.f32.gmra.mxu0 %v425
      %v480 = vpop.f32.mrf.mxu0
      %v481 = vadd.f32 %v458, %v480
      %482 = vmatmul.f32.gmra.mxu0 %v426
      %v483 = vpop.f32.mrf.mxu0
      %v484 = vadd.f32 %v458, %v483
      %485 = vmatmul.f32.gmra.mxu0 %v427
      %v486 = vpop.f32.mrf.mxu0
      %v487 = vadd.f32 %v458, %v486
      %488 = vmatmul.f32.gmra.mxu0 %v428
      %v489 = vpop.f32.mrf.mxu0
      %v490 = vadd.f32 %v458, %v489
      %491 = vmatmul.f32.gmra.mxu0 %v429
      %v492 = vpop.f32.mrf.mxu0
      %v493 = vadd.f32 %v458, %v492
      %494 = vmatmul.f32.gmra.mxu0 %v430
      %v495 = vpop.f32.mrf.mxu0
      %v496 = vadd.f32 %v458, %v495
      %497 = vmatmul.f32.gmra.mxu0 %v431
      %v498 = vpop.f32.mrf.mxu0
      %v499 = vadd.f32 %v458, %v498
      %500 = vmatmul.f32.gmra.mxu0 %v432
      %v501 = vpop.f32.mrf.mxu0
      %v502 = vadd.f32 %v458, %v501
      %503 = vmatmul.f32.gmra.mxu0 %v433
      %v504 = vpop.f32.mrf.mxu0
      %v505 = vadd.f32 %v458, %v504
      %506 = vmatmul.f32.gmra.mxu0 %v434
      %v507 = vpop.f32.mrf.mxu0
      %v508 = vadd.f32 %v458, %v507
      %509 = vmatmul.f32.gmra.mxu0 %v435
      %v510 = vpop.f32.mrf.mxu0
      %v511 = vadd.f32 %v458, %v510
      %512 = vmatmul.f32.gmra.mxu0 %v436
      %v513 = vpop.f32.mrf.mxu0
      %v514 = vadd.f32 %v458, %v513
      %515 = vmatmul.f32.gmra.mxu0 %v437
      %v516 = vpop.f32.mrf.mxu0
      %v517 = vadd.f32 %v458, %v516
      %518 = vmatmul.f32.gmra.mxu0 %v438
      %v519 = vpop.f32.mrf.mxu0
      %v520 = vadd.f32 %v458, %v519
      %521 = vmatmul.f32.gmra.mxu0 %v439
      %v522 = vpop.f32.mrf.mxu0
      %v523 = vadd.f32 %v458, %v522
      %524 = vdwg.mxu0
      %v525 = vmax.f32 %v478, 0.0
      %v526 = vmax.f32 %v481, 0.0
      %v527 = vmax.f32 %v484, 0.0
      %v528 = vmax.f32 %v487, 0.0
      %v529 = vmax.f32 %v490, 0.0
      %v530 = vmax.f32 %v493, 0.0
      %v531 = vmax.f32 %v496, 0.0
      %v532 = vmax.f32 %v499, 0.0
      %v533 = vmax.f32 %v502, 0.0
      %v534 = vmax.f32 %v505, 0.0
      %v535 = vmax.f32 %v508, 0.0
      %v536 = vmax.f32 %v511, 0.0
      %v537 = vmax.f32 %v514, 0.0
      %v538 = vmax.f32 %v517, 0.0
      %v539 = vmax.f32 %v520, 0.0
      %v540 = vmax.f32 %v523, 0.0
      %v541 = vld [vmem:[%s5] sm:$0xff]
      %v542 = vld [vmem:[%s5 + $0x8] sm:$0xff]
      %v543 = vld [vmem:[%s5 + $0x10] sm:$0xff]
      %v544 = vld [vmem:[%s5 + $0x18] sm:$0xff]
      %v545 = vld [vmem:[%s5 + $0x20] sm:$0xff]
      %v546 = vld [vmem:[%s5 + $0x28] sm:$0xff]
      %v547 = vld [vmem:[%s5 + $0x30] sm:$0xff]
      %v548 = vld [vmem:[%s5 + $0x38] sm:$0xff]
      %v549 = vld [vmem:[%s5 + $0x40] sm:$0xff]
      %v550 = vld [vmem:[%s5 + $0x48] sm:$0xff]
      %v551 = vld [vmem:[%s5 + $0x50] sm:$0xff]
      %v552 = vld [vmem:[%s5 + $0x58] sm:$0xff]
      %v553 = vld [vmem:[%s5 + $0x60] sm:$0xff]
      %v554 = vld [vmem:[%s5 + $0x68] sm:$0xff]
      %v555 = vld [vmem:[%s5 + $0x70] sm:$0xff]
      %v556 = vld [vmem:[%s5 + $0x78] sm:$0xff]
      %v557 = vld [vmem:[%s6] sm:$0x1]
      %v559 = vperm.slane %v557, 0
      %561 = vmatpush.msra.mxu0 %v556
      %562 = vmatpush.msra.mxu0 %v555
      %563 = vmatpush.msra.mxu0 %v554
      %564 = vmatpush.msra.mxu0 %v553
      %565 = vmatpush.msra.mxu0 %v552
      %566 = vmatpush.msra.mxu0 %v551
      %567 = vmatpush.msra.mxu0 %v550
      %568 = vmatpush.msra.mxu0 %v549
      %569 = vmatpush.msra.mxu0 %v548
      %570 = vmatpush.msra.mxu0 %v547
      %571 = vmatpush.msra.mxu0 %v546
      %572 = vmatpush.msra.mxu0 %v545
      %573 = vmatpush.msra.mxu0 %v544
      %574 = vmatpush.msra.mxu0 %v543
      %575 = vmatpush.msra.mxu0 %v542
      %576 = vmatpush.msra.mxu0 %v541
      %577 = vmatmul.f32.gmra.mxu0 %v525
      %v578 = vpop.f32.mrf.mxu0
      %v579 = vadd.f32 %v559, %v578
      %580 = vmatmul.f32.gmra.mxu0 %v526
      %v581 = vpop.f32.mrf.mxu0
      %v582 = vadd.f32 %v559, %v581
      %583 = vmatmul.f32.gmra.mxu0 %v527
      %v584 = vpop.f32.mrf.mxu0
      %v585 = vadd.f32 %v559, %v584
      %586 = vmatmul.f32.gmra.mxu0 %v528
      %v587 = vpop.f32.mrf.mxu0
      %v588 = vadd.f32 %v559, %v587
      %589 = vmatmul.f32.gmra.mxu0 %v529
      %v590 = vpop.f32.mrf.mxu0
      %v591 = vadd.f32 %v559, %v590
      %592 = vmatmul.f32.gmra.mxu0 %v530
      %v593 = vpop.f32.mrf.mxu0
      %v594 = vadd.f32 %v559, %v593
      %595 = vmatmul.f32.gmra.mxu0 %v531
      %v596 = vpop.f32.mrf.mxu0
      %v597 = vadd.f32 %v559, %v596
      %598 = vmatmul.f32.gmra.mxu0 %v532
      %v599 = vpop.f32.mrf.mxu0
      %v600 = vadd.f32 %v559, %v599
      %601 = vmatmul.f32.gmra.mxu0 %v533
      %v602 = vpop.f32.mrf.mxu0
      %v603 = vadd.f32 %v559, %v602
      %604 = vmatmul.f32.gmra.mxu0 %v534
      %v605 = vpop.f32.mrf.mxu0
      %v606 = vadd.f32 %v559, %v605
      %607 = vmatmul.f32.gmra.mxu0 %v535
      %v608 = vpop.f32.mrf.mxu0
      %v609 = vadd.f32 %v559, %v608
      %610 = vmatmul.f32.gmra.mxu0 %v536
      %v611 = vpop.f32.mrf.mxu0
      %v612 = vadd.f32 %v559, %v611
      %613 = vmatmul.f32.gmra.mxu0 %v537
      %v614 = vpop.f32.mrf.mxu0
      %v615 = vadd.f32 %v559, %v614
      %616 = vmatmul.f32.gmra.mxu0 %v538
      %v617 = vpop.f32.mrf.mxu0
      %v618 = vadd.f32 %v559, %v617
      %619 = vmatmul.f32.gmra.mxu0 %v539
      %v620 = vpop.f32.mrf.mxu0
      %v621 = vadd.f32 %v559, %v620
      %622 = vmatmul.f32.gmra.mxu0 %v540
      %v623 = vpop.f32.mrf.mxu0
      %v624 = vadd.f32 %v559, %v623
      %625 = vdwg.mxu0
      %v626 = vlaneseq
      %v627 = vand.u32 %v626, 127
      %vm628 = vcmp.lt.s32.totalorder %v627, 8
      %v629 = vsel %vm628, %v579, -1e+30
      %v630 = vsel %vm628, %v582, -1e+30
      %v631 = vsel %vm628, %v585, -1e+30
      %v632 = vsel %vm628, %v588, -1e+30
      %v633 = vsel %vm628, %v591, -1e+30
      %v634 = vsel %vm628, %v594, -1e+30
      %v635 = vsel %vm628, %v597, -1e+30
      %v636 = vsel %vm628, %v600, -1e+30
      %v637 = vsel %vm628, %v603, -1e+30
      %v638 = vsel %vm628, %v606, -1e+30
      %v639 = vsel %vm628, %v609, -1e+30
      %v640 = vsel %vm628, %v612, -1e+30
      %v641 = vsel %vm628, %v615, -1e+30
      %v642 = vsel %vm628, %v618, -1e+30
      %v643 = vsel %vm628, %v621, -1e+30
      %v644 = vsel %vm628, %v624, -1e+30
      %645 = vmax.xlane.f32.xlu0 %v629
      %v646 = vpop.xlane.xlu0 %645
      %647 = vmax.xlane.f32.xlu0 %v630
      %v648 = vpop.xlane.xlu0 %647
      %649 = vmax.xlane.f32.xlu0 %v631
      %v650 = vpop.xlane.xlu0 %649
      %651 = vmax.xlane.f32.xlu0 %v632
      %v652 = vpop.xlane.xlu0 %651
      %653 = vmax.xlane.f32.xlu0 %v633
      %v654 = vpop.xlane.xlu0 %653
      %655 = vmax.xlane.f32.xlu0 %v634
      %v656 = vpop.xlane.xlu0 %655
      %657 = vmax.xlane.f32.xlu0 %v635
      %v658 = vpop.xlane.xlu0 %657
      %659 = vmax.xlane.f32.xlu0 %v636
      %v660 = vpop.xlane.xlu0 %659
      %661 = vmax.xlane.f32.xlu0 %v637
      %v662 = vpop.xlane.xlu0 %661
      %663 = vmax.xlane.f32.xlu0 %v638
      %v664 = vpop.xlane.xlu0 %663
      %665 = vmax.xlane.f32.xlu0 %v639
      %v666 = vpop.xlane.xlu0 %665
      %667 = vmax.xlane.f32.xlu0 %v640
      %v668 = vpop.xlane.xlu0 %667
      %669 = vmax.xlane.f32.xlu0 %v641
      %v670 = vpop.xlane.xlu0 %669
      %671 = vmax.xlane.f32.xlu0 %v642
      %v672 = vpop.xlane.xlu0 %671
      %673 = vmax.xlane.f32.xlu0 %v643
      %v674 = vpop.xlane.xlu0 %673
      %675 = vmax.xlane.f32.xlu0 %v644
      %v676 = vpop.xlane.xlu0 %675
      %v677 = vsub.f32 %v629, %v646
      %v678 = vsub.f32 %v630, %v648
      %v679 = vsub.f32 %v631, %v650
      %v680 = vsub.f32 %v632, %v652
      %v681 = vsub.f32 %v633, %v654
      %v682 = vsub.f32 %v634, %v656
      %v683 = vsub.f32 %v635, %v658
      %v684 = vsub.f32 %v636, %v660
      %v685 = vsub.f32 %v637, %v662
      %v686 = vsub.f32 %v638, %v664
      %v687 = vsub.f32 %v639, %v666
      %v688 = vsub.f32 %v640, %v668
      %v689 = vsub.f32 %v641, %v670
      %v690 = vsub.f32 %v642, %v672
      %v691 = vsub.f32 %v643, %v674
      %v692 = vsub.f32 %v644, %v676
      %v693 = vmul.f32 %v677, 1.442695
      %v694 = vpow.pop %v693
      %v695 = vmul.f32 %v678, 1.442695
      %v696 = vpow.pop %v695
      %v697 = vmul.f32 %v679, 1.442695
      %v698 = vpow.pop %v697
      %v699 = vmul.f32 %v680, 1.442695
      %v700 = vpow.pop %v699
      %v701 = vmul.f32 %v681, 1.442695
      %v702 = vpow.pop %v701
      %v703 = vmul.f32 %v682, 1.442695
      %v704 = vpow.pop %v703
      %v705 = vmul.f32 %v683, 1.442695
      %v706 = vpow.pop %v705
      %v707 = vmul.f32 %v684, 1.442695
      %v708 = vpow.pop %v707
      %v709 = vmul.f32 %v685, 1.442695
      %v710 = vpow.pop %v709
      %v711 = vmul.f32 %v686, 1.442695
      %v712 = vpow.pop %v711
      %v713 = vmul.f32 %v687, 1.442695
      %v714 = vpow.pop %v713
      %v715 = vmul.f32 %v688, 1.442695
      %v716 = vpow.pop %v715
      %v717 = vmul.f32 %v689, 1.442695
      %v718 = vpow.pop %v717
      %v719 = vmul.f32 %v690, 1.442695
      %v720 = vpow.pop %v719
      %v721 = vmul.f32 %v691, 1.442695
      %v722 = vpow.pop %v721
      %v723 = vmul.f32 %v692, 1.442695
      %v724 = vpow.pop %v723
      %725 = vadd.xlane.f32.xlu0 %v694
      %v726 = vpop.xlane.xlu0 %725
      %727 = vadd.xlane.f32.xlu0 %v696
      %v728 = vpop.xlane.xlu0 %727
      %729 = vadd.xlane.f32.xlu0 %v698
      %v730 = vpop.xlane.xlu0 %729
      %731 = vadd.xlane.f32.xlu0 %v700
      %v732 = vpop.xlane.xlu0 %731
      %733 = vadd.xlane.f32.xlu0 %v702
      %v734 = vpop.xlane.xlu0 %733
      %735 = vadd.xlane.f32.xlu0 %v704
      %v736 = vpop.xlane.xlu0 %735
      %737 = vadd.xlane.f32.xlu0 %v706
      %v738 = vpop.xlane.xlu0 %737
      %739 = vadd.xlane.f32.xlu0 %v708
      %v740 = vpop.xlane.xlu0 %739
      %741 = vadd.xlane.f32.xlu0 %v710
      %v742 = vpop.xlane.xlu0 %741
      %743 = vadd.xlane.f32.xlu0 %v712
      %v744 = vpop.xlane.xlu0 %743
      %745 = vadd.xlane.f32.xlu0 %v714
      %v746 = vpop.xlane.xlu0 %745
      %747 = vadd.xlane.f32.xlu0 %v716
      %v748 = vpop.xlane.xlu0 %747
      %749 = vadd.xlane.f32.xlu0 %v718
      %v750 = vpop.xlane.xlu0 %749
      %751 = vadd.xlane.f32.xlu0 %v720
      %v752 = vpop.xlane.xlu0 %751
      %753 = vadd.xlane.f32.xlu0 %v722
      %v754 = vpop.xlane.xlu0 %753
      %755 = vadd.xlane.f32.xlu0 %v724
      %v756 = vpop.xlane.xlu0 %755
      %v757 = vrcp.pop %v726
      %v758 = vmul.f32 %v726, %v757
      %v759 = vsub.f32 1.0, %v758
      %v760 = vmul.f32 %v757, %v759
      %v761 = vadd.f32 %v757, %v760
      %vm762 = vweird.f32 %v726
      %vm763 = vweird.f32 %v757
      %vm764 = vmor %vm762, %vm763
      %v765 = vsel %vm764, %v757, %v761
      %v766 = vand.u32 2147483647, %v726
      %vm767 = vcmp.eq.f32.partialorder %v766, 8.507059e+37
      %v768 = vand.u32 %v726, 2147483648
      %v769 = vor.u32 1.1754944e-38, %v768
      %v770 = vsel %vm767, %v769, %v765
      %v771 = vmul.f32 1.0, %v770
      %v772 = vrcp.pop %v728
      %v773 = vmul.f32 %v728, %v772
      %v774 = vsub.f32 1.0, %v773
      %v775 = vmul.f32 %v772, %v774
      %v776 = vadd.f32 %v772, %v775
      %vm777 = vweird.f32 %v728
      %vm778 = vweird.f32 %v772
      %vm779 = vmor %vm777, %vm778
      %v780 = vsel %vm779, %v772, %v776
      %v781 = vand.u32 2147483647, %v728
      %vm782 = vcmp.eq.f32.partialorder %v781, 8.507059e+37
      %v783 = vand.u32 %v728, 2147483648
      %v784 = vor.u32 1.1754944e-38, %v783
      %v785 = vsel %vm782, %v784, %v780
      %v786 = vmul.f32 1.0, %v785
      %v787 = vrcp.pop %v730
      %v788 = vmul.f32 %v730, %v787
      %v789 = vsub.f32 1.0, %v788
      %v790 = vmul.f32 %v787, %v789
      %v791 = vadd.f32 %v787, %v790
      %vm792 = vweird.f32 %v730
      %vm793 = vweird.f32 %v787
      %vm794 = vmor %vm792, %vm793
      %v795 = vsel %vm794, %v787, %v791
      %v796 = vand.u32 2147483647, %v730
      %vm797 = vcmp.eq.f32.partialorder %v796, 8.507059e+37
      %v798 = vand.u32 %v730, 2147483648
      %v799 = vor.u32 1.1754944e-38, %v798
      %v800 = vsel %vm797, %v799, %v795
      %v801 = vmul.f32 1.0, %v800
      %v802 = vrcp.pop %v732
      %v803 = vmul.f32 %v732, %v802
      %v804 = vsub.f32 1.0, %v803
      %v805 = vmul.f32 %v802, %v804
      %v806 = vadd.f32 %v802, %v805
      %vm807 = vweird.f32 %v732
      %vm808 = vweird.f32 %v802
      %vm809 = vmor %vm807, %vm808
      %v810 = vsel %vm809, %v802, %v806
      %v811 = vand.u32 2147483647, %v732
      %vm812 = vcmp.eq.f32.partialorder %v811, 8.507059e+37
      %v813 = vand.u32 %v732, 2147483648
      %v814 = vor.u32 1.1754944e-38, %v813
      %v815 = vsel %vm812, %v814, %v810
      %v816 = vmul.f32 1.0, %v815
      %v817 = vrcp.pop %v734
      %v818 = vmul.f32 %v734, %v817
      %v819 = vsub.f32 1.0, %v818
      %v820 = vmul.f32 %v817, %v819
      %v821 = vadd.f32 %v817, %v820
      %vm822 = vweird.f32 %v734
      %vm823 = vweird.f32 %v817
      %vm824 = vmor %vm822, %vm823
      %v825 = vsel %vm824, %v817, %v821
      %v826 = vand.u32 2147483647, %v734
      %vm827 = vcmp.eq.f32.partialorder %v826, 8.507059e+37
      %v828 = vand.u32 %v734, 2147483648
      %v829 = vor.u32 1.1754944e-38, %v828
      %v830 = vsel %vm827, %v829, %v825
      %v831 = vmul.f32 1.0, %v830
      %v832 = vrcp.pop %v736
      %v833 = vmul.f32 %v736, %v832
      %v834 = vsub.f32 1.0, %v833
      %v835 = vmul.f32 %v832, %v834
      %v836 = vadd.f32 %v832, %v835
      %vm837 = vweird.f32 %v736
      %vm838 = vweird.f32 %v832
      %vm839 = vmor %vm837, %vm838
      %v840 = vsel %vm839, %v832, %v836
      %v841 = vand.u32 2147483647, %v736
      %vm842 = vcmp.eq.f32.partialorder %v841, 8.507059e+37
      %v843 = vand.u32 %v736, 2147483648
      %v844 = vor.u32 1.1754944e-38, %v843
      %v845 = vsel %vm842, %v844, %v840
      %v846 = vmul.f32 1.0, %v845
      %v847 = vrcp.pop %v738
      %v848 = vmul.f32 %v738, %v847
      %v849 = vsub.f32 1.0, %v848
      %v850 = vmul.f32 %v847, %v849
      %v851 = vadd.f32 %v847, %v850
      %vm852 = vweird.f32 %v738
      %vm853 = vweird.f32 %v847
      %vm854 = vmor %vm852, %vm853
      %v855 = vsel %vm854, %v847, %v851
      %v856 = vand.u32 2147483647, %v738
      %vm857 = vcmp.eq.f32.partialorder %v856, 8.507059e+37
      %v858 = vand.u32 %v738, 2147483648
      %v859 = vor.u32 1.1754944e-38, %v858
      %v860 = vsel %vm857, %v859, %v855
      %v861 = vmul.f32 1.0, %v860
      %v862 = vrcp.pop %v740
      %v863 = vmul.f32 %v740, %v862
      %v864 = vsub.f32 1.0, %v863
      %v865 = vmul.f32 %v862, %v864
      %v866 = vadd.f32 %v862, %v865
      %vm867 = vweird.f32 %v740
      %vm868 = vweird.f32 %v862
      %vm869 = vmor %vm867, %vm868
      %v870 = vsel %vm869, %v862, %v866
      %v871 = vand.u32 2147483647, %v740
      %vm872 = vcmp.eq.f32.partialorder %v871, 8.507059e+37
      %v873 = vand.u32 %v740, 2147483648
      %v874 = vor.u32 1.1754944e-38, %v873
      %v875 = vsel %vm872, %v874, %v870
      %v876 = vmul.f32 1.0, %v875
      %v877 = vrcp.pop %v742
      %v878 = vmul.f32 %v742, %v877
      %v879 = vsub.f32 1.0, %v878
      %v880 = vmul.f32 %v877, %v879
      %v881 = vadd.f32 %v877, %v880
      %vm882 = vweird.f32 %v742
      %vm883 = vweird.f32 %v877
      %vm884 = vmor %vm882, %vm883
      %v885 = vsel %vm884, %v877, %v881
      %v886 = vand.u32 2147483647, %v742
      %vm887 = vcmp.eq.f32.partialorder %v886, 8.507059e+37
      %v888 = vand.u32 %v742, 2147483648
      %v889 = vor.u32 1.1754944e-38, %v888
      %v890 = vsel %vm887, %v889, %v885
      %v891 = vmul.f32 1.0, %v890
      %v892 = vrcp.pop %v744
      %v893 = vmul.f32 %v744, %v892
      %v894 = vsub.f32 1.0, %v893
      %v895 = vmul.f32 %v892, %v894
      %v896 = vadd.f32 %v892, %v895
      %vm897 = vweird.f32 %v744
      %vm898 = vweird.f32 %v892
      %vm899 = vmor %vm897, %vm898
      %v900 = vsel %vm899, %v892, %v896
      %v901 = vand.u32 2147483647, %v744
      %vm902 = vcmp.eq.f32.partialorder %v901, 8.507059e+37
      %v903 = vand.u32 %v744, 2147483648
      %v904 = vor.u32 1.1754944e-38, %v903
      %v905 = vsel %vm902, %v904, %v900
      %v906 = vmul.f32 1.0, %v905
      %v907 = vrcp.pop %v746
      %v908 = vmul.f32 %v746, %v907
      %v909 = vsub.f32 1.0, %v908
      %v910 = vmul.f32 %v907, %v909
      %v911 = vadd.f32 %v907, %v910
      %vm912 = vweird.f32 %v746
      %vm913 = vweird.f32 %v907
      %vm914 = vmor %vm912, %vm913
      %v915 = vsel %vm914, %v907, %v911
      %v916 = vand.u32 2147483647, %v746
      %vm917 = vcmp.eq.f32.partialorder %v916, 8.507059e+37
      %v918 = vand.u32 %v746, 2147483648
      %v919 = vor.u32 1.1754944e-38, %v918
      %v920 = vsel %vm917, %v919, %v915
      %v921 = vmul.f32 1.0, %v920
      %v922 = vrcp.pop %v748
      %v923 = vmul.f32 %v748, %v922
      %v924 = vsub.f32 1.0, %v923
      %v925 = vmul.f32 %v922, %v924
      %v926 = vadd.f32 %v922, %v925
      %vm927 = vweird.f32 %v748
      %vm928 = vweird.f32 %v922
      %vm929 = vmor %vm927, %vm928
      %v930 = vsel %vm929, %v922, %v926
      %v931 = vand.u32 2147483647, %v748
      %vm932 = vcmp.eq.f32.partialorder %v931, 8.507059e+37
      %v933 = vand.u32 %v748, 2147483648
      %v934 = vor.u32 1.1754944e-38, %v933
      %v935 = vsel %vm932, %v934, %v930
      %v936 = vmul.f32 1.0, %v935
      %v937 = vrcp.pop %v750
      %v938 = vmul.f32 %v750, %v937
      %v939 = vsub.f32 1.0, %v938
      %v940 = vmul.f32 %v937, %v939
      %v941 = vadd.f32 %v937, %v940
      %vm942 = vweird.f32 %v750
      %vm943 = vweird.f32 %v937
      %vm944 = vmor %vm942, %vm943
      %v945 = vsel %vm944, %v937, %v941
      %v946 = vand.u32 2147483647, %v750
      %vm947 = vcmp.eq.f32.partialorder %v946, 8.507059e+37
      %v948 = vand.u32 %v750, 2147483648
      %v949 = vor.u32 1.1754944e-38, %v948
      %v950 = vsel %vm947, %v949, %v945
      %v951 = vmul.f32 1.0, %v950
      %v952 = vrcp.pop %v752
      %v953 = vmul.f32 %v752, %v952
      %v954 = vsub.f32 1.0, %v953
      %v955 = vmul.f32 %v952, %v954
      %v956 = vadd.f32 %v952, %v955
      %vm957 = vweird.f32 %v752
      %vm958 = vweird.f32 %v952
      %vm959 = vmor %vm957, %vm958
      %v960 = vsel %vm959, %v952, %v956
      %v961 = vand.u32 2147483647, %v752
      %vm962 = vcmp.eq.f32.partialorder %v961, 8.507059e+37
      %v963 = vand.u32 %v752, 2147483648
      %v964 = vor.u32 1.1754944e-38, %v963
      %v965 = vsel %vm962, %v964, %v960
      %v966 = vmul.f32 1.0, %v965
      %v967 = vrcp.pop %v754
      %v968 = vmul.f32 %v754, %v967
      %v969 = vsub.f32 1.0, %v968
      %v970 = vmul.f32 %v967, %v969
      %v971 = vadd.f32 %v967, %v970
      %vm972 = vweird.f32 %v754
      %vm973 = vweird.f32 %v967
      %vm974 = vmor %vm972, %vm973
      %v975 = vsel %vm974, %v967, %v971
      %v976 = vand.u32 2147483647, %v754
      %vm977 = vcmp.eq.f32.partialorder %v976, 8.507059e+37
      %v978 = vand.u32 %v754, 2147483648
      %v979 = vor.u32 1.1754944e-38, %v978
      %v980 = vsel %vm977, %v979, %v975
      %v981 = vmul.f32 1.0, %v980
      %v982 = vrcp.pop %v756
      %v983 = vmul.f32 %v756, %v982
      %v984 = vsub.f32 1.0, %v983
      %v985 = vmul.f32 %v982, %v984
      %v986 = vadd.f32 %v982, %v985
      %vm987 = vweird.f32 %v756
      %vm988 = vweird.f32 %v982
      %vm989 = vmor %vm987, %vm988
      %v990 = vsel %vm989, %v982, %v986
      %v991 = vand.u32 2147483647, %v756
      %vm992 = vcmp.eq.f32.partialorder %v991, 8.507059e+37
      %v993 = vand.u32 %v756, 2147483648
      %v994 = vor.u32 1.1754944e-38, %v993
      %v995 = vsel %vm992, %v994, %v990
      %v996 = vmul.f32 1.0, %v995
      %v997 = vmul.f32 %v694, %v771
      %v998 = vmul.f32 %v696, %v786
      %v999 = vmul.f32 %v698, %v801
      %v1000 = vmul.f32 %v700, %v816
      %v1001 = vmul.f32 %v702, %v831
      %v1002 = vmul.f32 %v704, %v846
      %v1003 = vmul.f32 %v706, %v861
      %v1004 = vmul.f32 %v708, %v876
      %v1005 = vmul.f32 %v710, %v891
      %v1006 = vmul.f32 %v712, %v906
      %v1007 = vmul.f32 %v714, %v921
      %v1008 = vmul.f32 %v716, %v936
      %v1009 = vmul.f32 %v718, %v951
      %v1010 = vmul.f32 %v720, %v966
      %v1011 = vmul.f32 %v722, %v981
      %v1012 = vmul.f32 %v724, %v996
      %1013 = vst [vmem:[%s315] sm:$0xff] %v997
      %1014 = vst [vmem:[%s315 + $0x8] sm:$0xff] %v998
      %1015 = vst [vmem:[%s315 + $0x10] sm:$0xff] %v999
      %1016 = vst [vmem:[%s315 + $0x18] sm:$0xff] %v1000
      %1017 = vst [vmem:[%s315 + $0x20] sm:$0xff] %v1001
      %1018 = vst [vmem:[%s315 + $0x28] sm:$0xff] %v1002
      %1019 = vst [vmem:[%s315 + $0x30] sm:$0xff] %v1003
      %1020 = vst [vmem:[%s315 + $0x38] sm:$0xff] %v1004
      %1021 = vst [vmem:[%s315 + $0x40] sm:$0xff] %v1005
      %1022 = vst [vmem:[%s315 + $0x48] sm:$0xff] %v1006
      %1023 = vst [vmem:[%s315 + $0x50] sm:$0xff] %v1007
      %1024 = vst [vmem:[%s315 + $0x58] sm:$0xff] %v1008
      %1025 = vst [vmem:[%s315 + $0x60] sm:$0xff] %v1009
      %1026 = vst [vmem:[%s315 + $0x68] sm:$0xff] %v1010
      %1027 = vst [vmem:[%s315 + $0x70] sm:$0xff] %v1011
      %1028 = vst [vmem:[%s315 + $0x78] sm:$0xff] %v1012
      %v1029 = vlog2.pop %v726
      %v1030 = vmul.f32 %v1029, 0.6931472
      %v1031 = vlog2.pop %v728
      %v1032 = vmul.f32 %v1031, 0.6931472
      %v1033 = vlog2.pop %v730
      %v1034 = vmul.f32 %v1033, 0.6931472
      %v1035 = vlog2.pop %v732
      %v1036 = vmul.f32 %v1035, 0.6931472
      %v1037 = vlog2.pop %v734
      %v1038 = vmul.f32 %v1037, 0.6931472
      %v1039 = vlog2.pop %v736
      %v1040 = vmul.f32 %v1039, 0.6931472
      %v1041 = vlog2.pop %v738
      %v1042 = vmul.f32 %v1041, 0.6931472
      %v1043 = vlog2.pop %v740
      %v1044 = vmul.f32 %v1043, 0.6931472
      %v1045 = vlog2.pop %v742
      %v1046 = vmul.f32 %v1045, 0.6931472
      %v1047 = vlog2.pop %v744
      %v1048 = vmul.f32 %v1047, 0.6931472
      %v1049 = vlog2.pop %v746
      %v1050 = vmul.f32 %v1049, 0.6931472
      %v1051 = vlog2.pop %v748
      %v1052 = vmul.f32 %v1051, 0.6931472
      %v1053 = vlog2.pop %v750
      %v1054 = vmul.f32 %v1053, 0.6931472
      %v1055 = vlog2.pop %v752
      %v1056 = vmul.f32 %v1055, 0.6931472
      %v1057 = vlog2.pop %v754
      %v1058 = vmul.f32 %v1057, 0.6931472
      %v1059 = vlog2.pop %v756
      %v1060 = vmul.f32 %v1059, 0.6931472
      %v1061 = vsub.f32 %v677, %v1030
      %v1062 = vsub.f32 %v678, %v1032
      %v1063 = vsub.f32 %v679, %v1034
      %v1064 = vsub.f32 %v680, %v1036
      %v1065 = vsub.f32 %v681, %v1038
      %v1066 = vsub.f32 %v682, %v1040
      %v1067 = vsub.f32 %v683, %v1042
      %v1068 = vsub.f32 %v684, %v1044
      %v1069 = vsub.f32 %v685, %v1046
      %v1070 = vsub.f32 %v686, %v1048
      %v1071 = vsub.f32 %v687, %v1050
      %v1072 = vsub.f32 %v688, %v1052
      %v1073 = vsub.f32 %v689, %v1054
      %v1074 = vsub.f32 %v690, %v1056
      %v1075 = vsub.f32 %v691, %v1058
      %v1076 = vsub.f32 %v692, %v1060
      %1077 = vst [vmem:[%s321] sm:$0xff] %v1061
      %1078 = vst [vmem:[%s321 + $0x8] sm:$0xff] %v1062
      %1079 = vst [vmem:[%s321 + $0x10] sm:$0xff] %v1063
      %1080 = vst [vmem:[%s321 + $0x18] sm:$0xff] %v1064
      %1081 = vst [vmem:[%s321 + $0x20] sm:$0xff] %v1065
      %1082 = vst [vmem:[%s321 + $0x28] sm:$0xff] %v1066
      %1083 = vst [vmem:[%s321 + $0x30] sm:$0xff] %v1067
      %1084 = vst [vmem:[%s321 + $0x38] sm:$0xff] %v1068
      %1085 = vst [vmem:[%s321 + $0x40] sm:$0xff] %v1069
      %1086 = vst [vmem:[%s321 + $0x48] sm:$0xff] %v1070
      %1087 = vst [vmem:[%s321 + $0x50] sm:$0xff] %v1071
      %1088 = vst [vmem:[%s321 + $0x58] sm:$0xff] %v1072
      %1089 = vst [vmem:[%s321 + $0x60] sm:$0xff] %v1073
      %1090 = vst [vmem:[%s321 + $0x68] sm:$0xff] %v1074
      %1091 = vst [vmem:[%s321 + $0x70] sm:$0xff] %v1075
      %1092 = vst [vmem:[%s321 + $0x78] sm:$0xff] %v1076
      %s1093 = smul.u32 16, %s20
      %p1094 = scmp.lt.s32.totalorder %s1093, 31
      %s1095 = scalar_select %p1094, %s1093, 31
      %s1096 = smul.addr %s1095, 8
      %s1097 = scalar_lea.vmem %s7, %s1096
      %s1098 = smul.u32 16, %s20
      %p1099 = scmp.lt.s32.totalorder %s1098, 31
      %s1100 = scalar_select %p1099, %s1098, 31
      %s1101 = smul.addr %s1100, 8
      %s1102 = scalar_lea.vmem %s8, %s1101
      // Predicated region
      $region49: #{actor_forward.1} parent=47 // pred_check
        %p1103 = pneg %p190
      $region50: #{actor_forward.1} parent=47 // pred_check_branch
        %1105 = sbr.rel (%p1103) target = $region52
      $region51: #{actor_forward.1} parent=47 // pred_region
        %s1106 = smul.u32 16, %s20
      $region52: #{actor_forward.1} parent=47 // pred_fallthru
        _
      // Predicated region
      $region53: #{actor_forward.1} parent=47 // pred_check
        %p1107 = pneg %p216
      $region54: #{actor_forward.1} parent=47 // pred_check_branch
        %1109 = sbr.rel (%p1107) target = $region56
      $region55: #{actor_forward.1} parent=47 // pred_region
        %s1110 = smul.u32 16, %s20
      $region56: #{actor_forward.1} parent=47 // pred_fallthru
        _
    $region48: #{actor_forward.1} parent=5 // pred_fallthru
      _
    %p1111 = scmp.le.s32.totalorder 2, %s15
    // Predicated region
    $region57: #{actor_forward.1} parent=5 // pred_check
      %p1112 = pneg %p1111
    $region58: #{actor_forward.1} parent=5 // pred_check_branch
      %1114 = sbr.rel (%p1112) target = $region60
    $region59: #{actor_forward.1} parent=5 // pred_region
      %s1115 = ssub.s32 %s15, 2
      // Predicated region
      $region61: #{actor_forward.1} parent=59 // pred_check
        %p1116 = pneg %p196
      $region62: #{actor_forward.1} parent=59 // pred_check_branch
        %1118 = sbr.rel (%p1116) target = $region64
      $region63: #{actor_forward.1} parent=59 // pred_region
        %s1119 = smul.u32 16, %s21
        %p1120 = scmp.lt.s32.totalorder %s1119, 31
        %s1121 = scalar_select %p1120, %s1119, 31
        %s1122 = smul.addr %s1121, 8
        %s1123 = scalar_lea.vmem %s7, %s1122
      $region64: #{actor_forward.1} parent=59 // pred_fallthru
        _
      // Predicated region
      $region65: #{actor_forward.1} parent=59 // pred_check
        %p1124 = pneg %p222
      $region66: #{actor_forward.1} parent=59 // pred_check_branch
        %1126 = sbr.rel (%p1124) target = $region68
      $region67: #{actor_forward.1} parent=59 // pred_region
        %s1127 = smul.u32 16, %s21
        %p1128 = scmp.lt.s32.totalorder %s1127, 31
        %s1129 = scalar_select %p1128, %s1127, 31
        %s1130 = smul.addr %s1129, 8
        %s1131 = scalar_lea.vmem %s8, %s1130
      $region68: #{actor_forward.1} parent=59 // pred_fallthru
        _
    $region60: #{actor_forward.1} parent=5 // pred_fallthru
      _
  $region6: #{actor_forward.1} parent=0 // loop_footer
    %s19 = sadd.s32 1, %s15
  $region7: #{actor_forward.1} parent=0 // loop_footer_branch
    %14 = sbr.rel target = $region3
  $region8: #{actor_forward.1} parent=0 // loop_exit
    _

</llo_original>
